<compile_context>
chip_gen: v7x
topology: tpu7x:2x2x1
jax: 0.10.0
libtpu: 0.0.40
codegen_flags: <defaults>
</compile_context>

<pallas_src>
import functools

import jax
import jax.numpy as jnp
from jax.experimental import pallas as pl
from jax.experimental.pallas import tpu as pltpu

IN_FEATURES = 4                             # total_clients
OUT_FEATURES = 1
LANES = 128
SAMPLES_PER_ROW = LANES // IN_FEATURES      # 32 samples per 128-lane row
SUBLANES = 8
ROW_ALIGN = SAMPLES_PER_ROW * SUBLANES      # pad B to a multiple of 256

# 8192 rows/step -> 4 MiB input + 1 MiB output per step.  Double-buffered
# VMEM (with the 32-lane output block padded to 128 lanes in VMEM) is ~16 MiB,
# so raise the scoped-VMEM limit; 48 MiB leaves headroom and stays below
# v7x's 64 MiB physical VMEM per TensorCore.
DEFAULT_TILE_ROWS = 8192
MIN_GRID_STEPS = 4
VMEM_LIMIT_BYTES = 48 * 1024 * 1024


def _round_up(n: int, m: int) -> int:
    return ((n + m - 1) // m) * m


def _linear_kernel(b_ref, s_ref, x_ref, o_ref):
    # b_ref: SMEM (1,) f32                       -- bias (single copy)
    # s_ref: VMEM (128, 32) f32 (grid-resident)  -- selection-weight matrix
    # x_ref: VMEM (tile_rows, 128) f32           -- 32 interleaved samples/row
    # o_ref: VMEM (tile_rows, 32) f32            -- 32 outputs/row (== (B, 1))
    acc = jnp.dot(x_ref[...], s_ref[...], preferred_element_type=jnp.float32)
    o_ref[...] = (acc + b_ref[0]).astype(o_ref.dtype)


@functools.partial(jax.jit, static_argnames=("max_tile_rows",))
def smallnn_fhd_forward(x, w, b, *, max_tile_rows=DEFAULT_TILE_ROWS):
    """Forward pass of SmallNN_FHD.

    x: (B, 4) f32  -- same layout as the PyTorch module input.
    w: (4,)   f32  -- fc1.weight flattened (out_features == 1).
    b: (1,)   f32  -- fc1.bias.
    returns (B, 1) f32 == x @ w[:, None] + b
    """
    B = x.shape[0]
    x = x.astype(jnp.float32)
    w = w.reshape(IN_FEATURES).astype(jnp.float32)
    b = b.reshape(OUT_FEATURES).astype(jnp.float32)

    # Pad only to the 256-sample row/sublane granularity.  When B is already
    # aligned (the common large-batch case) this is a no-op and the reshape
    # below is a zero-copy reinterpretation of the contiguous (B, 4) buffer.
    b_pad = _round_up(max(B, 1), ROW_ALIGN)
    if b_pad != B:
        x = jnp.pad(x, ((0, b_pad - B), (0, 0)))
    r_pad = b_pad // SAMPLES_PER_ROW                  # rows of 128 lanes
    x_rows = x.reshape(r_pad, LANES)                  # free row-major reshape

    # Selection-weight matrix: S[l, j] = w[l % 4] if l // 4 == j else 0, so
    # (x_rows @ S)[r, j] == dot(x[32*r + j, :], w).
    lane = jnp.arange(LANES)
    col = jnp.arange(SAMPLES_PER_ROW)
    s_mat = jnp.where((lane[:, None] // IN_FEATURES) == col[None, :],
                      w[lane % IN_FEATURES][:, None],
                      jnp.float32(0.0))               # (128, 32)

    # Tile the row axis; keep >= MIN_GRID_STEPS steps so both v7x TensorCores
    # get work and DMA/compute double-buffering has something to overlap.
    tile_rows = min(max_tile_rows,
                    max(SUBLANES,
                        _round_up(pl.cdiv(r_pad, MIN_GRID_STEPS), SUBLANES)))
    grid = (pl.cdiv(r_pad, tile_rows),)               # partial last tile OK

    out = pl.pallas_call(
        _linear_kernel,
        out_shape=jax.ShapeDtypeStruct((r_pad, SAMPLES_PER_ROW), jnp.float32),
        grid_spec=pltpu.PrefetchScalarGridSpec(
            num_scalar_prefetch=0,
            grid=grid,
            in_specs=[
                # Bias scalar on the scalar path; one copy, never re-DMA'd.
                pl.BlockSpec(memory_space=pltpu.MemorySpace.SMEM),
                # Selection matrix: grid-resident VMEM block.
                pl.BlockSpec((LANES, SAMPLES_PER_ROW), lambda i: (0, 0)),
                # Streaming, lane-dense x row tiles (double-buffered).
                pl.BlockSpec((tile_rows, LANES), lambda i: (i, 0)),
            ],
            out_specs=pl.BlockSpec((tile_rows, SAMPLES_PER_ROW),
                                   lambda i: (i, 0)),
        ),
        compiler_params=pltpu.CompilerParams(
            dimension_semantics=("parallel",),
            vmem_limit_bytes=VMEM_LIMIT_BYTES,
        ),
    )(b, s_mat, x_rows)

    # (r_pad, 32) row-major is exactly (b_pad, 1): reshape is free; slice off
    # padding only when padding was actually added.
    flat = out.reshape(b_pad)
    if b_pad != B:
        flat = flat[:B]
    return flat.reshape(B, OUT_FEATURES)


def init_params(key):
    """Deterministic init mimicking nn.Linear(4, 1): U(-1/sqrt(4), 1/sqrt(4))."""
    kw, kb = jax.random.split(key)
    bound = 1.0 / (IN_FEATURES ** 0.5)
    w = jax.random.uniform(kw, (IN_FEATURES,),
                           minval=-bound, maxval=bound, dtype=jnp.float32)
    b = jax.random.uniform(kb, (OUT_FEATURES,),
                           minval=-bound, maxval=bound, dtype=jnp.float32)
    return w, b


if __name__ == "__main__":
    key = jax.random.PRNGKey(0)
    kx, kp = jax.random.split(key)

    batch = 2
    x = jax.random.normal(kx, (batch, IN_FEATURES), dtype=jnp.float32)
    w, b = init_params(kp)

    out = smallnn_fhd_forward(x, w, b)
    out = jax.block_until_ready(out)

    # Cross-check against plain JAX reference (same semantics as nn.Linear).
    ref = x @ w.reshape(IN_FEATURES, OUT_FEATURES) + b.reshape(1, OUT_FEATURES)
    assert out.shape == (batch, OUT_FEATURES)
    assert jnp.allclose(out, ref, atol=1e-5, rtol=1e-5)

    print("KERNEL_OK")
</pallas_src>

<mosaic_0001>
module attributes {stable_mosaic.version = 11 : i64} {
  func.func @_linear_kernel(%arg0: i32, %arg1: memref<1xf32, #tpu.memory_space<smem>>, %arg2: memref<128x32xf32, #tpu.memory_space<vmem>>, %arg3: memref<8x128xf32, #tpu.memory_space<vmem>>, %arg4: memref<8x32xf32, #tpu.memory_space<vmem>>) attributes {dimension_semantics = [#tpu.dimension_semantics<parallel>], iteration_bounds = array<i64: 1>, scalar_prefetch = 0 : i64, scratch_operands = 0 : i64, tpu.core_type = #tpu.core_type<tc>, window_params = [{transform_indices = @transform_0, window_bounds = array<i64: 1>}, {pipeline_mode = #tpu.pipeline_mode<synchronous>, transform_indices = @transform_1, window_bounds = array<i64: 128, 32>}, {transform_indices = @transform_2, window_bounds = array<i64: 8, 128>}, {transform_indices = @transform_3, window_bounds = array<i64: 8, 32>}]} {
    %c0 = arith.constant 0 : index
    %c0_0 = arith.constant 0 : index
    %0 = vector.load %arg3[%c0, %c0_0] : memref<8x128xf32, #tpu.memory_space<vmem>>, vector<8x128xf32>
    %c0_1 = arith.constant 0 : index
    %c0_2 = arith.constant 0 : index
    %1 = vector.load %arg2[%c0_1, %c0_2] : memref<128x32xf32, #tpu.memory_space<vmem>>, vector<128x32xf32>
    %cst = arith.constant dense<0.000000e+00> : vector<8x32xf32>
    %2 = tpu.matmul %0, %1, %cst {dimension_numbers = #tpu.dot_dimension_numbers<[1], [0], [0], [1], [0, 0, 1, 1], [], []>} : vector<8x128xf32>, vector<128x32xf32>, vector<8x32xf32> -> vector<8x32xf32>
    %c0_3 = arith.constant 0 : index
    %3 = memref.load %arg1[%c0_3] : memref<1xf32, #tpu.memory_space<smem>>
    %4 = vector.broadcast %3 : f32 to vector<8x32xf32>
    %5 = arith.addf %2, %4 : vector<8x32xf32>
    %c0_4 = arith.constant 0 : index
    %c0_5 = arith.constant 0 : index
    %6 = vector.load %arg4[%c0_4, %c0_5] : memref<8x32xf32, #tpu.memory_space<vmem>>, vector<8x32xf32>
    tpu.vector_store %arg4[%c0_4, %c0_5], %5 {strides = array<i32>} : memref<8x32xf32, #tpu.memory_space<vmem>>, vector<8x32xf32>,
    return
  }
  func.func @transform_0(%arg0: i32) -> i32 {
    %c0_i32 = arith.constant 0 : i32
    %c0_i32_0 = arith.constant 0 : i32
    return %c0_i32 : i32
  }
  func.func @transform_1(%arg0: i32) -> (i32, i32) {
    %c0_i32 = arith.constant 0 : i32
    %c0_i32_0 = arith.constant 0 : i32
    %c0_i32_1 = arith.constant 0 : i32
    return %c0_i32, %c0_i32_0 : i32, i32
  }
  func.func @transform_2(%arg0: i32) -> (i32, i32) {
    %c0_i32 = arith.constant 0 : i32
    %c0_i32_0 = arith.constant 0 : i32
    return %arg0, %c0_i32 : i32, i32
  }
  func.func @transform_3(%arg0: i32) -> (i32, i32) {
    %c0_i32 = arith.constant 0 : i32
    %c0_i32_0 = arith.constant 0 : i32
    return %arg0, %c0_i32 : i32, i32
  }
}

</mosaic_0001>

<llo_original>
// kernel: smallnn_fhd_forward.1
$region0: #{smallnn_fhd_forward.1}
  #allocation0 [shape = 'u32[]', space=smem, size = 0x4, offset = 0x4, fixed_abs, tag = 'smem constant byte address 0x4 - core index']
  #allocation1 [shape = 'u32[144,128]{1,0:T(1,128)}', space=vmem, size = 0x12000, scoped, tag = 'internal scratch']
  #allocation2 [shape = 'f32[1]{0:T(128)S(6)}', space=smem, size = 0x200, scoped, tag = 'scoped memory for smallnn_fhd_forward.1']
  %s0 = inlined_call_operand.<no memory space> [shape: f32[1], index: 0, kind: input, shape index: {}]
  %s1 = inlined_call_operand.vmem [shape: f32[128,32], index: 1, kind: input, shape index: {}]
  %s2 = inlined_call_operand.vmem [shape: f32[8,128], index: 2, kind: input, shape index: {}]
  %s3 = inlined_call_operand.vmem [shape: f32[8,32], index: 3, kind: output, shape index: {}]
  %s4 = sld [smem:[#allocation0]]
  $region22: #{smallnn_fhd_forward.1} parent=0
    _
  %s6 = ssub.s32 1, %s4
  %s7 = scalar_select 0, %s6, %s4
  %8 = sst [smem:[#allocation2]] %s0
  // Predicated region
  $region2: #{smallnn_fhd_forward.1} parent=0 // pred_check
    _
  $region3: #{smallnn_fhd_forward.1} parent=0 // pred_check_branch
    %10 = sbr.rel (0) target = $region5
  $region4: #{smallnn_fhd_forward.1} parent=0 // pred_region
    _
  $region5: #{smallnn_fhd_forward.1} parent=0 // pred_fallthru
    _
  // Predicated region
  $region6: #{smallnn_fhd_forward.1} parent=0 // pred_check
    _
  $region7: #{smallnn_fhd_forward.1} parent=0 // pred_check_branch
    %12 = sbr.rel (0) target = $region9
  $region8: #{smallnn_fhd_forward.1} parent=0 // pred_region
    _
  $region9: #{smallnn_fhd_forward.1} parent=0 // pred_fallthru
    _
  // Predicated region
  $region10: #{smallnn_fhd_forward.1} parent=0 // pred_check
    _
  $region11: #{smallnn_fhd_forward.1} parent=0 // pred_check_branch
    %14 = sbr.rel (0) target = $region13
  $region12: #{smallnn_fhd_forward.1} parent=0 // pred_region
    _
  $region13: #{smallnn_fhd_forward.1} parent=0 // pred_fallthru
    _
  %v15 = vld [vmem:[%s2] sm:$0xff]
  %v16 = vld [vmem:[%s1] sm:$0xff]
  %v17 = vld [vmem:[%s1 + $0x8] sm:$0xff]
  %v18 = vld [vmem:[%s1 + $0x10] sm:$0xff]
  %v19 = vld [vmem:[%s1 + $0x18] sm:$0xff]
  %v20 = vld [vmem:[%s1 + $0x20] sm:$0xff]
  %v21 = vld [vmem:[%s1 + $0x28] sm:$0xff]
  %v22 = vld [vmem:[%s1 + $0x30] sm:$0xff]
  %v23 = vld [vmem:[%s1 + $0x38] sm:$0xff]
  %v24 = vld [vmem:[%s1 + $0x40] sm:$0xff]
  %v25 = vld [vmem:[%s1 + $0x48] sm:$0xff]
  %v26 = vld [vmem:[%s1 + $0x50] sm:$0xff]
  %v27 = vld [vmem:[%s1 + $0x58] sm:$0xff]
  %v28 = vld [vmem:[%s1 + $0x60] sm:$0xff]
  %v29 = vld [vmem:[%s1 + $0x68] sm:$0xff]
  %v30 = vld [vmem:[%s1 + $0x70] sm:$0xff]
  %v31 = vld [vmem:[%s1 + $0x78] sm:$0xff]
  %s32 = sld [smem:[#allocation2]]
  %v33 = vstv %s32
  %34 = vmatprep.subr.mxu0 0.0
  %35 = vmatpush1.msra.mxu0 %v16
  %36 = vmatprep.subr.mxu0 0.0
  %37 = vmatpush1.msra.mxu0 %v17
  %38 = vmatprep.subr.mxu0 0.0
  %39 = vmatpush1.msra.mxu0 %v18
  %40 = vmatprep.subr.mxu0 0.0
  %41 = vmatpush1.msra.mxu0 %v19
  %42 = vmatprep.subr.mxu0 0.0
  %43 = vmatpush1.msra.mxu0 %v20
  %44 = vmatprep.subr.mxu0 0.0
  %45 = vmatpush1.msra.mxu0 %v21
  %46 = vmatprep.subr.mxu0 0.0
  %47 = vmatpush1.msra.mxu0 %v22
  %48 = vmatprep.subr.mxu0 0.0
  %49 = vmatpush1.msra.mxu0 %v23
  %50 = vmatprep.subr.mxu0 0.0
  %51 = vmatpush1.msra.mxu0 %v24
  %52 = vmatprep.subr.mxu0 0.0
  %53 = vmatpush1.msra.mxu0 %v25
  %54 = vmatprep.subr.mxu0 0.0
  %55 = vmatpush1.msra.mxu0 %v26
  %56 = vmatprep.subr.mxu0 0.0
  %57 = vmatpush1.msra.mxu0 %v27
  %58 = vmatprep.subr.mxu0 0.0
  %59 = vmatpush1.msra.mxu0 %v28
  %60 = vmatprep.subr.mxu0 0.0
  %61 = vmatpush1.msra.mxu0 %v29
  %62 = vmatprep.subr.mxu0 0.0
  %63 = vmatpush1.msra.mxu0 %v30
  %64 = vmatprep.subr.mxu0 0.0
  %65 = vmatpush1.msra.mxu0 %v31
  %66 = vmatprep.subr.mxu0 0.0
  %67 = vmatpush1.msra.mxu0 0.0
  %68 = vmatprep.subr.mxu0 0.0
  %69 = vmatpush1.msra.mxu0 0.0
  %70 = vmatprep.subr.mxu0 0.0
  %71 = vmatpush1.msra.mxu0 0.0
  %72 = vmatprep.subr.mxu0 0.0
  %73 = vmatpush1.msra.mxu0 0.0
  %74 = vmatprep.subr.mxu0 0.0
  %75 = vmatpush1.msra.mxu0 0.0
  %76 = vmatprep.subr.mxu0 0.0
  %77 = vmatpush1.msra.mxu0 0.0
  %78 = vmatprep.subr.mxu0 0.0
  %79 = vmatpush1.msra.mxu0 0.0
  %80 = vmatprep.subr.mxu0 0.0
  %81 = vmatpush1.msra.mxu0 0.0
  %82 = vmatprep.subr.mxu0 0.0
  %83 = vmatpush1.msra.mxu0 0.0
  %84 = vmatprep.subr.mxu0 0.0
  %85 = vmatpush1.msra.mxu0 0.0
  %86 = vmatprep.subr.mxu0 0.0
  %87 = vmatpush1.msra.mxu0 0.0
  %88 = vmatprep.subr.mxu0 0.0
  %89 = vmatpush1.msra.mxu0 0.0
  %90 = vmatprep.subr.mxu0 0.0
  %91 = vmatpush1.msra.mxu0 0.0
  %92 = vmatprep.subr.mxu0 0.0
  %93 = vmatpush1.msra.mxu0 0.0
  %94 = vmatprep.subr.mxu0 0.0
  %95 = vmatpush1.msra.mxu0 0.0
  %96 = vmatprep.subr.mxu0 0.0
  %97 = vmatpush1.msra.mxu0 0.0
  %98 = vmatprep.mubr.f32.mxu0 0.0
  %99 = vmatmul.mubr.f32.gmra.mrb[0].mxu0 %v15
  %v100 = vpop.f32.mrb[0].mxu0
  %v101 = vadd.f32 %v33, %v100
  %v102 = vpop.f32.mrb[0].mxu0
  %103 = vdwg.mxu0
  %vm104 = vcmask 261120
  %105 = vst.msk [vmem:[%s3] sm:$0xff] %vm104, %v101
  // Predicated region
  $region14: #{smallnn_fhd_forward.1} parent=0 // pred_check
    _
  $region15: #{smallnn_fhd_forward.1} parent=0 // pred_check_branch
    %107 = sbr.rel (0) target = $region17
  $region16: #{smallnn_fhd_forward.1} parent=0 // pred_region
    _
  $region17: #{smallnn_fhd_forward.1} parent=0 // pred_fallthru
    _
  // Predicated region
  $region18: #{smallnn_fhd_forward.1} parent=0 // pred_check
    _
  $region19: #{smallnn_fhd_forward.1} parent=0 // pred_check_branch
    %109 = sbr.rel (0) target = $region21
  $region20: #{smallnn_fhd_forward.1} parent=0 // pred_region
    _
  $region21: #{smallnn_fhd_forward.1} parent=0 // pred_fallthru
    _

</llo_original>
